<compile_context>
chip_gen: v7x
topology: tpu7x:2x2x1
jax: 0.10.0
libtpu: 0.0.40
codegen_flags: <defaults>
</compile_context>

<pallas_src>
import functools
import math

import numpy as np
import jax
import jax.numpy as jnp
from jax.experimental import pallas as pl
from jax.experimental.pallas import tpu as pltpu


def _cdiv(a, b):
    return -(-a // b)


def _layernorm_row_kernel(x_ref, a_ref, b_ref, o_ref, *, eps, inv_n, inv_nm1):
    """Generic path: reduce over the full last dim."""
    x = x_ref[...].astype(jnp.float32)                        # (tile_rows, ft_dim)
    mean = jnp.sum(x, axis=-1, keepdims=True) * jnp.float32(inv_n)
    diff = x - mean
    var = jnp.sum(diff * diff, axis=-1, keepdims=True) * jnp.float32(inv_nm1)
    std = jnp.sqrt(var)
    inv = pl.reciprocal(std + jnp.float32(eps), approx=False)  # EUP
    a = a_ref[...].astype(jnp.float32)                         # (1, ft_dim)
    b = b_ref[...].astype(jnp.float32)                         # (1, ft_dim)
    o_ref[...] = (diff * inv * a + b).astype(o_ref.dtype)


def _layernorm_packed_kernel(x_ref, seg_ref, a_ref, b_ref, o_ref, *, eps, inv_n, inv_nm1):
    """Lane-dense path: `pack = width // ft_dim` logical rows per physical row.

    Per-segment sums are computed with a resident (width, width) block-diagonal
    0/1 matrix on the MXU (idle otherwise), broadcasting each segment's sum
    back to all of its lanes. All stores are full-lane (unmasked) vst.
    """
    x = x_ref[...].astype(jnp.float32)                         # (tile_rows, width)
    seg = seg_ref[...]                                         # (width, width) f32
    seg_sum = jnp.dot(x, seg, preferred_element_type=jnp.float32)
    mean = seg_sum * jnp.float32(inv_n)
    diff = x - mean
    seg_sq = jnp.dot(diff * diff, seg, preferred_element_type=jnp.float32)
    std = jnp.sqrt(seg_sq * jnp.float32(inv_nm1))
    inv = pl.reciprocal(std + jnp.float32(eps), approx=False)
    a = a_ref[...].astype(jnp.float32)                         # (1, width) = gamma tiled
    b = b_ref[...].astype(jnp.float32)                         # (1, width) = beta tiled
    o_ref[...] = (diff * inv * a + b).astype(o_ref.dtype)


def _choose_tile_rows(rows_eff, width, itemsize):
    """Pick (tile_rows, vmem_limit_bytes): dtype- and generation-aware."""
    sub = {1: 32, 2: 16}.get(itemsize, 8)          # sublane multiple per dtype
    vmem_cap = 64 * 1024 * 1024                    # conservative default (v7x)
    try:
        info = pltpu.get_tpu_info()
        vmem_cap = int(getattr(info, "vmem_capacity_bytes", vmem_cap))
    except Exception:
        pass
    if vmem_cap >= 96 * 1024 * 1024:               # v5e / v6e: 128 MiB VMEM
        budget, vmem_limit = 40 * 1024 * 1024, 80 * 1024 * 1024
    else:                                          # v7x: 64 MiB VMEM, stay small
        budget, vmem_limit = 16 * 1024 * 1024, 32 * 1024 * 1024

    # Per-row bytes: double-buffered in + out tiles in the native dtype plus
    # ~4 f32 rows of in-kernel intermediates (x, diff, seg_sum, seg_sq).
    per_row = width * (4 * itemsize + 16)
    cap = max(sub, (budget // per_row) // sub * sub)
    cap = min(cap, 4096)

    # Enforce a minimum pipeline depth (~8 blocks) so DMA overlaps compute and
    # v7x can shard the "parallel" row axis across both TensorCores.
    min_blocks = 8
    depth_cap = max(sub, _cdiv(_cdiv(rows_eff, min_blocks), sub) * sub)
    tile = max(sub, min(cap, depth_cap))

    if rows_eff <= tile:
        return rows_eff, vmem_limit                # single block == full extent (tiny)

    # Prefer a nearby divisor of rows_eff so the last tile is not ragged.
    if rows_eff % tile != 0:
        for cand in range(tile, max(sub, tile - 8 * sub) - 1, -sub):
            if rows_eff % cand == 0:
                tile = cand
                break
    return tile, vmem_limit


def layer_norm(x, a_2, b_2, eps=1e-6):
    """LayerNorm over the last axis of x. x: (..., ft_dim)."""
    orig_shape = x.shape
    ft_dim = orig_shape[-1]
    rows = 1
    for d in orig_shape[:-1]:
        rows *= d
    itemsize = jnp.dtype(x.dtype).itemsize

    # Lane-dense packing: width = lcm(ft_dim, 128), capped at 512, for hidden
    # sizes that are not already a multiple of 128. Requires rows % pack == 0
    # so the wrapper reshape is a pure (copy-free) reshape.
    packed = False
    width, pack = ft_dim, 1
    if ft_dim > 1 and ft_dim % 128 != 0:
        width_p = math.lcm(ft_dim, 128)
        pack_p = width_p // ft_dim
        if width_p <= 512 and rows % pack_p == 0 and rows > 0:
            packed, width, pack = True, width_p, pack_p

    if packed:
        a_w = jnp.tile(a_2.reshape(1, ft_dim), (1, pack))
        b_w = jnp.tile(b_2.reshape(1, ft_dim), (1, pack))
        seg_idx = np.arange(width) // ft_dim
        seg_mat = jnp.asarray((seg_idx[:, None] == seg_idx[None, :]).astype(np.float32))
        kernel = functools.partial(
            _layernorm_packed_kernel, eps=float(eps),
            inv_n=1.0 / ft_dim, inv_nm1=1.0 / (ft_dim - 1))
    else:
        a_w = a_2.reshape(1, ft_dim)
        b_w = b_2.reshape(1, ft_dim)
        # ft_dim == 1: unbiased std divides by zero -> torch yields NaN.
        inv_nm1 = 1.0 / (ft_dim - 1) if ft_dim > 1 else float("nan")
        kernel = functools.partial(
            _layernorm_row_kernel, eps=float(eps),
            inv_n=1.0 / ft_dim, inv_nm1=inv_nm1)

    rows_eff = max(1, rows // pack)
    xw = x.reshape(rows_eff, width)

    tile_rows, vmem_limit = _choose_tile_rows(rows_eff, width, itemsize)
    grid_rows = _cdiv(rows_eff, tile_rows)

    in_specs = [pl.BlockSpec((tile_rows, width), lambda i: (i, 0))]
    args = [xw]
    if packed:
        in_specs.append(pl.BlockSpec((width, width), lambda i: (0, 0)))  # seg_mat: resident
        args.append(seg_mat)
    in_specs.append(pl.BlockSpec((1, width), lambda i: (0, 0)))          # gamma: resident
    in_specs.append(pl.BlockSpec((1, width), lambda i: (0, 0)))          # beta: resident
    args += [a_w, b_w]

    out = pl.pallas_call(
        kernel,
        out_shape=jax.ShapeDtypeStruct((rows_eff, width), x.dtype),
        grid=(grid_rows,),
        in_specs=in_specs,
        out_specs=pl.BlockSpec((tile_rows, width), lambda i: (i, 0)),
        compiler_params=pltpu.CompilerParams(
            dimension_semantics=("parallel",),
            vmem_limit_bytes=vmem_limit,
        ),
    )(*args)

    return out.reshape(orig_shape)


if __name__ == "__main__":
    # Module: LayerNorm(ft_dim=32); input: (batch=2, seq=8, hidden=32)
    batch, seq, hidden = 2, 8, 32
    key = jax.random.PRNGKey(0)
    x = jax.random.normal(key, (batch, seq, hidden), dtype=jnp.float32)

    # Deterministic parameter init, same as the module's __init__:
    a_2 = jnp.ones((hidden,), dtype=jnp.float32)   # scale
    b_2 = jnp.zeros((hidden,), dtype=jnp.float32)  # shift

    y = layer_norm(x, a_2, b_2, eps=1e-6)
    y = jax.block_until_ready(y)

    # Pure-JAX reference of the torch forward (unbiased std, eps added to std).
    mean = jnp.mean(x, axis=-1, keepdims=True)
    std = jnp.std(x, axis=-1, keepdims=True, ddof=1)
    ref = a_2 * (x - mean) / (std + 1e-6) + b_2
    assert jnp.allclose(y, ref, atol=1e-5, rtol=1e-5), "mismatch vs reference"

    print("KERNEL_OK")
</pallas_src>

<mosaic_0001>
module attributes {stable_mosaic.version = 11 : i64} {
  func.func @_layernorm_packed_kernel(%arg0: i32, %arg1: memref<4x128xf32, #tpu.memory_space<vmem>>, %arg2: memref<128x128xf32, #tpu.memory_space<vmem>>, %arg3: memref<1x128xf32, #tpu.memory_space<vmem>>, %arg4: memref<1x128xf32, #tpu.memory_space<vmem>>, %arg5: memref<4x128xf32, #tpu.memory_space<vmem>>) attributes {dimension_semantics = [#tpu.dimension_semantics<parallel>], iteration_bounds = array<i64: 1>, scalar_prefetch = 0 : i64, scratch_operands = 0 : i64, tpu.core_type = #tpu.core_type<tc>, window_params = [{transform_indices = @transform_0, window_bounds = array<i64: 4, 128>}, {pipeline_mode = #tpu.pipeline_mode<synchronous>, transform_indices = @transform_1, window_bounds = array<i64: 128, 128>}, {pipeline_mode = #tpu.pipeline_mode<synchronous>, transform_indices = @transform_2, window_bounds = array<i64: 1, 128>}, {pipeline_mode = #tpu.pipeline_mode<synchronous>, transform_indices = @transform_3, window_bounds = array<i64: 1, 128>}, {transform_indices = @transform_4, window_bounds = array<i64: 4, 128>}]} {
    %c0 = arith.constant 0 : index
    %c0_0 = arith.constant 0 : index
    %0 = vector.load %arg1[%c0, %c0_0] : memref<4x128xf32, #tpu.memory_space<vmem>>, vector<4x128xf32>
    %c0_1 = arith.constant 0 : index
    %c0_2 = arith.constant 0 : index
    %1 = vector.load %arg2[%c0_1, %c0_2] : memref<128x128xf32, #tpu.memory_space<vmem>>, vector<128x128xf32>
    %cst = arith.constant dense<0.000000e+00> : vector<4x128xf32>
    %2 = tpu.matmul %0, %1, %cst {dimension_numbers = #tpu.dot_dimension_numbers<[1], [0], [0], [1], [0, 0, 1, 1], [], []>} : vector<4x128xf32>, vector<128x128xf32>, vector<4x128xf32> -> vector<4x128xf32>
    %cst_3 = arith.constant 3.125000e-02 : f32
    %3 = vector.broadcast %cst_3 : f32 to vector<4x128xf32>
    %4 = arith.mulf %2, %3 : vector<4x128xf32>
    %5 = arith.subf %0, %4 : vector<4x128xf32>
    %6 = arith.mulf %5, %5 : vector<4x128xf32>
    %cst_4 = arith.constant dense<0.000000e+00> : vector<4x128xf32>
    %7 = tpu.matmul %6, %1, %cst_4 {dimension_numbers = #tpu.dot_dimension_numbers<[1], [0], [0], [1], [0, 0, 1, 1], [], []>} : vector<4x128xf32>, vector<128x128xf32>, vector<4x128xf32> -> vector<4x128xf32>
    %cst_5 = arith.constant 0.0322580636 : f32
    %8 = vector.broadcast %cst_5 : f32 to vector<4x128xf32>
    %9 = arith.mulf %7, %8 : vector<4x128xf32>
    %10 = math.sqrt %9 : vector<4x128xf32>
    %cst_6 = arith.constant 9.99999997E-7 : f32
    %11 = vector.broadcast %cst_6 : f32 to vector<4x128xf32>
    %12 = arith.addf %10, %11 : vector<4x128xf32>
    %13 = tpu.reciprocal %12 : vector<4x128xf32> -> vector<4x128xf32>
    %c0_7 = arith.constant 0 : index
    %c0_8 = arith.constant 0 : index
    %14 = vector.load %arg3[%c0_7, %c0_8] : memref<1x128xf32, #tpu.memory_space<vmem>>, vector<1x128xf32>
    %c0_9 = arith.constant 0 : index
    %c0_10 = arith.constant 0 : index
    %15 = vector.load %arg4[%c0_9, %c0_10] : memref<1x128xf32, #tpu.memory_space<vmem>>, vector<1x128xf32>
    %16 = arith.mulf %5, %13 : vector<4x128xf32>
    %17 = vector.broadcast %14 : vector<1x128xf32> to vector<4x128xf32>
    %18 = arith.mulf %16, %17 : vector<4x128xf32>
    %19 = vector.broadcast %15 : vector<1x128xf32> to vector<4x128xf32>
    %20 = arith.addf %18, %19 : vector<4x128xf32>
    %c0_11 = arith.constant 0 : index
    %c0_12 = arith.constant 0 : index
    %21 = vector.load %arg5[%c0_11, %c0_12] : memref<4x128xf32, #tpu.memory_space<vmem>>, vector<4x128xf32>
    tpu.vector_store %arg5[%c0_11, %c0_12], %20 {strides = array<i32>} : memref<4x128xf32, #tpu.memory_space<vmem>>, vector<4x128xf32>,
    return
  }
  func.func @transform_0(%arg0: i32) -> (i32, i32) {
    %c0_i32 = arith.constant 0 : i32
    %c0_i32_0 = arith.constant 0 : i32
    return %arg0, %c0_i32 : i32, i32
  }
  func.func @transform_1(%arg0: i32) -> (i32, i32) {
    %c0_i32 = arith.constant 0 : i32
    %c0_i32_0 = arith.constant 0 : i32
    %c0_i32_1 = arith.constant 0 : i32
    return %c0_i32, %c0_i32_0 : i32, i32
  }
  func.func @transform_2(%arg0: i32) -> (i32, i32) {
    %c0_i32 = arith.constant 0 : i32
    %c0_i32_0 = arith.constant 0 : i32
    %c0_i32_1 = arith.constant 0 : i32
    return %c0_i32, %c0_i32_0 : i32, i32
  }
  func.func @transform_3(%arg0: i32) -> (i32, i32) {
    %c0_i32 = arith.constant 0 : i32
    %c0_i32_0 = arith.constant 0 : i32
    %c0_i32_1 = arith.constant 0 : i32
    return %c0_i32, %c0_i32_0 : i32, i32
  }
  func.func @transform_4(%arg0: i32) -> (i32, i32) {
    %c0_i32 = arith.constant 0 : i32
    %c0_i32_0 = arith.constant 0 : i32
    return %arg0, %c0_i32 : i32, i32
  }
}

</mosaic_0001>

<llo_original>
// kernel: tpu_custom_call.1
$region0: #{tpu_custom_call.1}
  #allocation0 [shape = 'u32[]', space=smem, size = 0x4, offset = 0x4, fixed_abs, tag = 'smem constant byte address 0x4 - core index']
  #allocation1 [shape = 'u32[144,128]{1,0:T(1,128)}', space=vmem, size = 0x12000, scoped, tag = 'internal scratch']
  %s0 = inlined_call_operand.hbm [shape: f32[4,128], index: 0, kind: input, shape index: {}]
  %s1 = inlined_call_operand.hbm [shape: f32[128,128], index: 1, kind: input, shape index: {}]
  %s2 = inlined_call_operand.vmem [shape: f32[1,128], index: 2, kind: input, shape index: {}]
  %s3 = inlined_call_operand.vmem [shape: f32[1,128], index: 3, kind: input, shape index: {}]
  %s4 = inlined_call_operand.hbm [shape: f32[4,128], index: 4, kind: output, shape index: {}]
  %s5 = sld [smem:[#allocation0]]
  $region34: #{tpu_custom_call.1} parent=0
    _
  %s7 = ssub.s32 1, %s5
  %s8 = scalar_select 0, %s7, %s5
  $region1: #{tpu_custom_call.1} parent=0
    #allocation2 [shape = 'u8[2048]{0}', space=vmem, size = 0x800, scoped, tag = 'input window, operand 0, single buffered']
    #allocation3 [shape = 's32[1]{0}', space=sflag, size = 0x4, scoped, tag = 'scoped memory for tpu_custom_call.1']
    #allocation4 [shape = 's32[1]{0}', space=sflag, size = 0x4, scoped, tag = 'scoped memory for tpu_custom_call.1']
    #allocation5 [shape = 'u8[65536]{0}', space=vmem, size = 0x10000, scoped, tag = 'input window, operand 1, single buffered']
    #allocation6 [shape = 's32[1]{0}', space=sflag, size = 0x4, scoped, tag = 'scoped memory for tpu_custom_call.1']
    #allocation7 [shape = 'u8[2048]{0}', space=vmem, size = 0x800, scoped, tag = 'output window, operand 0, single buffered']
    %9 = vsyncpa [#allocation3], 0
    %10 = vsyncpa [#allocation6], 0
    %11 = vsyncpa [#allocation4], 0
    // Predicated region
    $region2: #{tpu_custom_call.1} parent=1 // pred_check
      _
    $region3: #{tpu_custom_call.1} parent=1 // pred_check_branch
      %13 = sbr.rel (0) target = $region5
    $region4: #{tpu_custom_call.1} parent=1 // pred_region
      %s15 = ssub.s32 64, 64
      %16 = vsyncadd [#allocation3], %s15
      %s18 = sshll.u32 [#allocation2], 4
      %s19 = int_to_ptr.vmem [resolvable:$true] %s18
      %21 = dma.hbm_to_vmem [thread:$0]  %s0, 64, %s19, [#allocation3]
    $region5: #{tpu_custom_call.1} parent=1 // pred_fallthru
      _
    // Predicated region
    $region6: #{tpu_custom_call.1} parent=1 // pred_check
      _
    $region7: #{tpu_custom_call.1} parent=1 // pred_check_branch
      %23 = sbr.rel (0) target = $region9
    $region8: #{tpu_custom_call.1} parent=1 // pred_region
      %s25 = ssub.s32 2048, 2048
      %26 = vsyncadd [#allocation6], %s25
      %s27 = sshll.u32 [#allocation5], 4
      %s28 = int_to_ptr.vmem [resolvable:$true] %s27
      %33 = dma.hbm_to_vmem [thread:$0]  %s1, 2048, %s28, [#allocation6], 128, 128, 8
    $region9: #{tpu_custom_call.1} parent=1 // pred_fallthru
      _
    // Predicated region
    $region10: #{tpu_custom_call.1} parent=1 // pred_check
      _
    $region11: #{tpu_custom_call.1} parent=1 // pred_check_branch
      %35 = sbr.rel (0) target = $region13
    $region12: #{tpu_custom_call.1} parent=1 // pred_region
      _
    $region13: #{tpu_custom_call.1} parent=1 // pred_fallthru
      _
    // Predicated region
    $region14: #{tpu_custom_call.1} parent=1 // pred_check
      _
    $region15: #{tpu_custom_call.1} parent=1 // pred_check_branch
      %37 = sbr.rel (0) target = $region17
    $region16: #{tpu_custom_call.1} parent=1 // pred_region
      _
    $region17: #{tpu_custom_call.1} parent=1 // pred_fallthru
      _
    // Predicated region
    $region18: #{tpu_custom_call.1} parent=1 // pred_check
      _
    $region19: #{tpu_custom_call.1} parent=1 // pred_check_branch
      %39 = sbr.rel (0) target = $region21
    $region20: #{tpu_custom_call.1} parent=1 // pred_region
      %40 = dma.done [#allocation3], 64
    $region21: #{tpu_custom_call.1} parent=1 // pred_fallthru
      _
    // Predicated region
    $region22: #{tpu_custom_call.1} parent=1 // pred_check
      _
    $region23: #{tpu_custom_call.1} parent=1 // pred_check_branch
      %42 = sbr.rel (0) target = $region25
    $region24: #{tpu_custom_call.1} parent=1 // pred_region
      %43 = dma.done [#allocation6], 2048
    $region25: #{tpu_custom_call.1} parent=1 // pred_fallthru
      _
    %v44 = vld [vmem:[#allocation2] sm:$0xf]
    %v45 = vld [vmem:[#allocation5] sm:$0xff]
    %v46 = vld [vmem:[#allocation5 + $0x8] sm:$0xff]
    %v47 = vld [vmem:[#allocation5 + $0x10] sm:$0xff]
    %v48 = vld [vmem:[#allocation5 + $0x18] sm:$0xff]
    %v49 = vld [vmem:[#allocation5 + $0x20] sm:$0xff]
    %v50 = vld [vmem:[#allocation5 + $0x28] sm:$0xff]
    %v51 = vld [vmem:[#allocation5 + $0x30] sm:$0xff]
    %v52 = vld [vmem:[#allocation5 + $0x38] sm:$0xff]
    %v53 = vld [vmem:[#allocation5 + $0x40] sm:$0xff]
    %v54 = vld [vmem:[#allocation5 + $0x48] sm:$0xff]
    %v55 = vld [vmem:[#allocation5 + $0x50] sm:$0xff]
    %v56 = vld [vmem:[#allocation5 + $0x58] sm:$0xff]
    %v57 = vld [vmem:[#allocation5 + $0x60] sm:$0xff]
    %v58 = vld [vmem:[#allocation5 + $0x68] sm:$0xff]
    %v59 = vld [vmem:[#allocation5 + $0x70] sm:$0xff]
    %v60 = vld [vmem:[#allocation5 + $0x78] sm:$0xff]
    %61 = vmatprep.subr.mxu0 0.0
    %62 = vmatpush1.msra.mxu0 %v45
    %63 = vmatprep.subr.mxu0 0.0
    %64 = vmatpush1.msra.mxu0 %v46
    %65 = vmatprep.subr.mxu0 0.0
    %66 = vmatpush1.msra.mxu0 %v47
    %67 = vmatprep.subr.mxu0 0.0
    %68 = vmatpush1.msra.mxu0 %v48
    %69 = vmatprep.subr.mxu0 0.0
    %70 = vmatpush1.msra.mxu0 %v49
    %71 = vmatprep.subr.mxu0 0.0
    %72 = vmatpush1.msra.mxu0 %v50
    %73 = vmatprep.subr.mxu0 0.0
    %74 = vmatpush1.msra.mxu0 %v51
    %75 = vmatprep.subr.mxu0 0.0
    %76 = vmatpush1.msra.mxu0 %v52
    %77 = vmatprep.subr.mxu0 0.0
    %78 = vmatpush1.msra.mxu0 %v53
    %79 = vmatprep.subr.mxu0 0.0
    %80 = vmatpush1.msra.mxu0 %v54
    %81 = vmatprep.subr.mxu0 0.0
    %82 = vmatpush1.msra.mxu0 %v55
    %83 = vmatprep.subr.mxu0 0.0
    %84 = vmatpush1.msra.mxu0 %v56
    %85 = vmatprep.subr.mxu0 0.0
    %86 = vmatpush1.msra.mxu0 %v57
    %87 = vmatprep.subr.mxu0 0.0
    %88 = vmatpush1.msra.mxu0 %v58
    %89 = vmatprep.subr.mxu0 0.0
    %90 = vmatpush1.msra.mxu0 %v59
    %91 = vmatprep.subr.mxu0 0.0
    %92 = vmatpush1.msra.mxu0 %v60
    %93 = vmatprep.subr.mxu0 0.0
    %94 = vmatpush1.msra.mxu0 0.0
    %95 = vmatprep.subr.mxu0 0.0
    %96 = vmatpush1.msra.mxu0 0.0
    %97 = vmatprep.subr.mxu0 0.0
    %98 = vmatpush1.msra.mxu0 0.0
    %99 = vmatprep.subr.mxu0 0.0
    %100 = vmatpush1.msra.mxu0 0.0
    %101 = vmatprep.subr.mxu0 0.0
    %102 = vmatpush1.msra.mxu0 0.0
    %103 = vmatprep.subr.mxu0 0.0
    %104 = vmatpush1.msra.mxu0 0.0
    %105 = vmatprep.subr.mxu0 0.0
    %106 = vmatpush1.msra.mxu0 0.0
    %107 = vmatprep.subr.mxu0 0.0
    %108 = vmatpush1.msra.mxu0 0.0
    %109 = vmatprep.subr.mxu0 0.0
    %110 = vmatpush1.msra.mxu0 0.0
    %111 = vmatprep.subr.mxu0 0.0
    %112 = vmatpush1.msra.mxu0 0.0
    %113 = vmatprep.subr.mxu0 0.0
    %114 = vmatpush1.msra.mxu0 0.0
    %115 = vmatprep.subr.mxu0 0.0
    %116 = vmatpush1.msra.mxu0 0.0
    %117 = vmatprep.subr.mxu0 0.0
    %118 = vmatpush1.msra.mxu0 0.0
    %119 = vmatprep.subr.mxu0 0.0
    %120 = vmatpush1.msra.mxu0 0.0
    %121 = vmatprep.subr.mxu0 0.0
    %122 = vmatpush1.msra.mxu0 0.0
    %123 = vmatprep.subr.mxu0 0.0
    %124 = vmatpush1.msra.mxu0 0.0
    %125 = vmatprep.mubr.f32.mxu0 0.0
    %126 = vmatmul.mubr.f32.gmra.mrb[0].mxu0 %v44
    %v127 = vpop.f32.mrb[0].mxu0
    %v128 = vadd.f32 0.0, %v127
    %v129 = vpop.f32.mrb[0].mxu0
    %130 = vdwg.mxu0
    %v131 = vmul.f32 %v128, 0.03125
    %v132 = vsub.f32 %v44, %v131
    %v133 = vmul.f32 %v132, %v132
    %134 = vmatprep.subr.mxu0 0.0
    %135 = vmatpush1.msra.mxu0 %v45
    %136 = vmatprep.subr.mxu0 0.0
    %137 = vmatpush1.msra.mxu0 %v46
    %138 = vmatprep.subr.mxu0 0.0
    %139 = vmatpush1.msra.mxu0 %v47
    %140 = vmatprep.subr.mxu0 0.0
    %141 = vmatpush1.msra.mxu0 %v48
    %142 = vmatprep.subr.mxu0 0.0
    %143 = vmatpush1.msra.mxu0 %v49
    %144 = vmatprep.subr.mxu0 0.0
    %145 = vmatpush1.msra.mxu0 %v50
    %146 = vmatprep.subr.mxu0 0.0
    %147 = vmatpush1.msra.mxu0 %v51
    %148 = vmatprep.subr.mxu0 0.0
    %149 = vmatpush1.msra.mxu0 %v52
    %150 = vmatprep.subr.mxu0 0.0
    %151 = vmatpush1.msra.mxu0 %v53
    %152 = vmatprep.subr.mxu0 0.0
    %153 = vmatpush1.msra.mxu0 %v54
    %154 = vmatprep.subr.mxu0 0.0
    %155 = vmatpush1.msra.mxu0 %v55
    %156 = vmatprep.subr.mxu0 0.0
    %157 = vmatpush1.msra.mxu0 %v56
    %158 = vmatprep.subr.mxu0 0.0
    %159 = vmatpush1.msra.mxu0 %v57
    %160 = vmatprep.subr.mxu0 0.0
    %161 = vmatpush1.msra.mxu0 %v58
    %162 = vmatprep.subr.mxu0 0.0
    %163 = vmatpush1.msra.mxu0 %v59
    %164 = vmatprep.subr.mxu0 0.0
    %165 = vmatpush1.msra.mxu0 %v60
    %166 = vmatprep.subr.mxu0 0.0
    %167 = vmatpush1.msra.mxu0 0.0
    %168 = vmatprep.subr.mxu0 0.0
    %169 = vmatpush1.msra.mxu0 0.0
    %170 = vmatprep.subr.mxu0 0.0
    %171 = vmatpush1.msra.mxu0 0.0
    %172 = vmatprep.subr.mxu0 0.0
    %173 = vmatpush1.msra.mxu0 0.0
    %174 = vmatprep.subr.mxu0 0.0
    %175 = vmatpush1.msra.mxu0 0.0
    %176 = vmatprep.subr.mxu0 0.0
    %177 = vmatpush1.msra.mxu0 0.0
    %178 = vmatprep.subr.mxu0 0.0
    %179 = vmatpush1.msra.mxu0 0.0
    %180 = vmatprep.subr.mxu0 0.0
    %181 = vmatpush1.msra.mxu0 0.0
    %182 = vmatprep.subr.mxu0 0.0
    %183 = vmatpush1.msra.mxu0 0.0
    %184 = vmatprep.subr.mxu0 0.0
    %185 = vmatpush1.msra.mxu0 0.0
    %186 = vmatprep.subr.mxu0 0.0
    %187 = vmatpush1.msra.mxu0 0.0
    %188 = vmatprep.subr.mxu0 0.0
    %189 = vmatpush1.msra.mxu0 0.0
    %190 = vmatprep.subr.mxu0 0.0
    %191 = vmatpush1.msra.mxu0 0.0
    %192 = vmatprep.subr.mxu0 0.0
    %193 = vmatpush1.msra.mxu0 0.0
    %194 = vmatprep.subr.mxu0 0.0
    %195 = vmatpush1.msra.mxu0 0.0
    %196 = vmatprep.subr.mxu0 0.0
    %197 = vmatpush1.msra.mxu0 0.0
    %198 = vmatprep.mubr.f32.mxu0 0.0
    %199 = vmatmul.mubr.f32.gmra.mrb[0].mxu0 %v133
    %v200 = vpop.f32.mrb[0].mxu0
    %v201 = vadd.f32 0.0, %v200
    %v202 = vpop.f32.mrb[0].mxu0
    %203 = vdwg.mxu0
    %v204 = vmul.f32 %v201, 0.032258064
    %v205 = vrsqrt.pop %v204
    %v206 = vmul.f32 %v204, %v205
    %vm207 = vcmp.eq.f32.partialorder %v204, inf
    %v208 = vsel %vm207, %v204, %v206
    %vm209 = vcmp.eq.f32.partialorder %v204, 0.0
    %v210 = vand.u32 %v204, 2147483648
    %v211 = vsel %vm209, %v210, %v208
    %v212 = vadd.f32 %v211, 1e-06
    %v213 = vrcp.pop %v212
    %v214 = vld [vmem:[%s2] sm:$0x1]
    %v215 = vld [vmem:[%s3] sm:$0x1]
    %v216 = vmul.f32 %v132, %v213
    %v218 = vlaneseq
    %v219 = vshrl.u32 %v218, 7
    %v220 = vsub.s32 0, %v219
    %v221 = vrot.slane %v214, %v220
    %v223 = vmul.f32 %v216, %v221
    %v225 = vlaneseq
    %v226 = vshrl.u32 %v225, 7
    %v227 = vsub.s32 0, %v226
    %v228 = vrot.slane %v215, %v227
    %v230 = vadd.f32 %v223, %v228
    %231 = vst [vmem:[#allocation7] sm:$0xf] %v230
    // Predicated region
    $region26: #{tpu_custom_call.1} parent=1 // pred_check
      _
    $region27: #{tpu_custom_call.1} parent=1 // pred_check_branch
      %233 = sbr.rel (0) target = $region29
    $region28: #{tpu_custom_call.1} parent=1 // pred_region
      %s235 = ssub.s32 64, 64
      %236 = vsyncadd [#allocation4], %s235
      %s238 = sshll.u32 [#allocation7], 4
      %s239 = int_to_ptr.vmem [resolvable:$true] %s238
      %241 = dma.vmem_to_hbm [thread:$0]  %s239, 64, %s4, [#allocation4]
    $region29: #{tpu_custom_call.1} parent=1 // pred_fallthru
      _
    // Predicated region
    $region30: #{tpu_custom_call.1} parent=1 // pred_check
      _
    $region31: #{tpu_custom_call.1} parent=1 // pred_check_branch
      %243 = sbr.rel (0) target = $region33
    $region32: #{tpu_custom_call.1} parent=1 // pred_region
      %244 = dma.done [#allocation4], 64
    $region33: #{tpu_custom_call.1} parent=1 // pred_fallthru
      _
    %245 = vsyncpa [#allocation3], 1
    %246 = vsyncpa [#allocation6], 1
    %247 = vsyncpa [#allocation4], 1

</llo_original>
